<compile_context>
chip_gen: v7x
topology: tpu7x:2x2x1
jax: 0.10.0
libtpu: 0.0.40
codegen_flags: <defaults>
</compile_context>

<pallas_src>
import functools

import jax
import jax.numpy as jnp
from jax.experimental import pallas as pl
from jax.experimental.pallas import tpu as pltpu

LANE = 128


def _round_up(n: int, m: int) -> int:
    return ((n + m - 1) // m) * m


# --------------------------------------------------------------------------
# Kernel
# --------------------------------------------------------------------------
def mlp_kernel(x_ref, w1_ref, b1_ref, w2_ref, b2_ref, o_ref):
    # hidden = relu(x @ W1 + b1)   (f32 accumulation on the MXU)
    h = jnp.dot(x_ref[...], w1_ref[...], preferred_element_type=jnp.float32)
    h = h + b1_ref[...]                  # b1 is (1, H_pad), broadcasts over rows
    h = jnp.maximum(h, 0.0)
    # out = hidden @ W2 + b2
    y = jnp.dot(h.astype(w2_ref.dtype), w2_ref[...],
                preferred_element_type=jnp.float32)
    y = y + b2_ref[...]                  # b2 is (1, D_out_pad)
    o_ref[...] = y.astype(o_ref.dtype)


# --------------------------------------------------------------------------
# One-time parameter prep (hoisted out of the per-call path)
# --------------------------------------------------------------------------
def prepare_params(w1, b1, w2, b2):
    """Pad weights/biases to lane-dense shapes ONCE at parameter-init time.

    w1: [D_in, H]  b1: [H]  w2: [H, D_out]  b2: [D_out]
    Returns (w1_p [D_in, H_p], b1_p [1, H_p], w2_p [H_p, D_out_p],
             b2_p [1, D_out_p]).  Zero padding is mathematically inert for
    Linear->ReLU->Linear.  Note: D_in is NOT padded (x stays unpadded in K).
    """
    d_in, h = w1.shape
    d_out = w2.shape[1]
    h_p = _round_up(h, LANE)
    d_out_p = _round_up(d_out, LANE)

    w1_p = jnp.pad(w1, ((0, 0), (0, h_p - h)))
    b1_p = jnp.pad(b1, (0, h_p - h)).reshape(1, h_p)
    w2_p = jnp.pad(w2, ((0, h_p - h), (0, d_out_p - d_out)))
    b2_p = jnp.pad(b2, (0, d_out_p - d_out)).reshape(1, d_out_p)
    return w1_p, b1_p, w2_p, b2_p


def pick_batch_tile(batch: int) -> int:
    """Per-generation grid-step choice (static, evaluated once in Python)."""
    try:
        kind = jax.devices()[0].device_kind.lower()
    except Exception:  # pragma: no cover - defensive
        kind = ""
    b8 = _round_up(max(batch, 8), 8)
    if "v7" in kind:
        # 2 TensorCores: give each core (at least) one tile; cap at 512 rows.
        tile = _round_up(-(-b8 // 2), 8)
        return min(tile, 512)
    # Single TensorCore (v5e / v6e): fewest grid steps; cap tile at 1024 rows.
    return min(b8, 1024)


# --------------------------------------------------------------------------
# Forward pass (returns lane-dense padded slab [B_p, D_out_p])
# --------------------------------------------------------------------------
@functools.partial(jax.jit, static_argnames=("batch_tile",))
def two_layer_nn_padded(x, w1_p, b1_p, w2_p, b2_p, *, batch_tile: int = 128):
    """Fused Linear->ReLU->Linear.

    x: [B, D_in] (features unpadded), params from prepare_params.
    Returns the padded output slab [B_p, D_out_p]; slice in the consumer if
    the logical [B, D_out] view is needed.
    """
    B, D_in = x.shape
    H_p = w1_p.shape[1]
    D_out_p = w2_p.shape[1]

    TB = batch_tile
    B_p = _round_up(B, TB)
    if B_p != B:  # pad batch rows only (no feature-dim padding of x)
        x = jnp.pad(x, ((0, B_p - B), (0, 0)))
    n_tiles = B_p // TB

    grid_spec = pltpu.PrefetchScalarGridSpec(
        num_scalar_prefetch=0,
        grid=(n_tiles,),
        in_specs=[
            pl.BlockSpec((TB, D_in), lambda i: (i, 0)),       # x: tiled over batch
            pl.BlockSpec((D_in, H_p), lambda i: (0, 0)),      # W1: resident
            pl.BlockSpec((1, H_p), lambda i: (0, 0)),         # b1: resident
            pl.BlockSpec((H_p, D_out_p), lambda i: (0, 0)),   # W2: resident
            pl.BlockSpec((1, D_out_p), lambda i: (0, 0)),     # b2: resident
        ],
        out_specs=pl.BlockSpec((TB, D_out_p), lambda i: (i, 0)),
    )

    itemsize = jnp.dtype(x.dtype).itemsize
    cost = pl.CostEstimate(
        flops=2 * B_p * (D_in * H_p + H_p * D_out_p),
        transcendentals=0,
        bytes_accessed=itemsize * (B_p * D_in + D_in * H_p + H_p
                                   + H_p * D_out_p + D_out_p
                                   + B_p * D_out_p),
    )

    return pl.pallas_call(
        mlp_kernel,
        out_shape=jax.ShapeDtypeStruct((B_p, D_out_p), x.dtype),
        grid_spec=grid_spec,
        compiler_params=pltpu.CompilerParams(
            dimension_semantics=("parallel",),   # megacore: batch tiles across TCs
        ),
        cost_estimate=cost,
    )(x, w1_p, b1_p, w2_p, b2_p)


def two_layer_nn(x, w1_p, b1_p, w2_p, b2_p, d_out, *, batch_tile: int = 128):
    """Convenience wrapper returning the logical [B, d_out] view."""
    out_p = two_layer_nn_padded(x, w1_p, b1_p, w2_p, b2_p,
                                batch_tile=batch_tile)
    return out_p[:x.shape[0], :d_out]


# --------------------------------------------------------------------------
# Init helpers matching the PyTorch module
# --------------------------------------------------------------------------
def _xavier_uniform(key, shape, gain):
    # shape = (fan_out, fan_in) like torch; return transposed [in, out] layout
    fan_out, fan_in = shape
    bound = gain * jnp.sqrt(6.0 / (fan_in + fan_out))
    w = jax.random.uniform(key, shape, jnp.float32, -bound, bound)
    return w.T  # [fan_in, fan_out]


if __name__ == "__main__":
    # TwoLayerNN(dim_input=32, num_hidden=64, dim_output=16), batch of 256.
    B, D_IN, HID, D_OUT = 256, 32, 64, 16

    key = jax.random.PRNGKey(0)
    kx, k1, k2, kb1, kb2 = jax.random.split(key, 5)

    x = jax.random.normal(kx, (B, D_IN), jnp.float32)

    gain = jnp.sqrt(2.0)  # nn.init.calculate_gain('relu')
    w1 = _xavier_uniform(k1, (HID, D_IN), gain)    # -> [D_IN, HID]
    w2 = _xavier_uniform(k2, (D_OUT, HID), gain)   # -> [HID, D_OUT]
    # nn.Linear default bias init: U(-1/sqrt(fan_in), 1/sqrt(fan_in))
    b1 = jax.random.uniform(kb1, (HID,), jnp.float32,
                            -1.0 / jnp.sqrt(D_IN), 1.0 / jnp.sqrt(D_IN))
    b2 = jax.random.uniform(kb2, (D_OUT,), jnp.float32,
                            -1.0 / jnp.sqrt(HID), 1.0 / jnp.sqrt(HID))

    # One-time parameter prep (hoisted out of the per-call jitted path).
    w1_p, b1_p, w2_p, b2_p = prepare_params(w1, b1, w2, b2)
    w1_p, b1_p, w2_p, b2_p = jax.block_until_ready((w1_p, b1_p, w2_p, b2_p))

    # Per-generation tile choice: 2 tiles on v7x (dual TC), 1 tile on v5e/v6e.
    bt = pick_batch_tile(B)

    out_pad = two_layer_nn_padded(x, w1_p, b1_p, w2_p, b2_p, batch_tile=bt)
    out_pad = jax.block_until_ready(out_pad)
    # Consumer-side slice back to the logical shape (drop this if the padded
    # lane-dense slab is acceptable downstream).
    out = out_pad[:B, :D_OUT]

    # Pure-JAX reference for correctness.
    ref = jnp.maximum(x @ w1 + b1, 0.0) @ w2 + b2
    assert out.shape == (B, D_OUT), out.shape
    assert jnp.allclose(out, ref, atol=1e-5, rtol=1e-5), (
        float(jnp.max(jnp.abs(out - ref))))

    print("KERNEL_OK")
</pallas_src>

<mosaic_0001>
module attributes {stable_mosaic.version = 11 : i64} {
  func.func @mlp_kernel(%arg0: i32, %arg1: memref<256x32xf32, #tpu.memory_space<vmem>>, %arg2: memref<32x128xf32, #tpu.memory_space<vmem>>, %arg3: memref<1x128xf32, #tpu.memory_space<vmem>>, %arg4: memref<128x128xf32, #tpu.memory_space<vmem>>, %arg5: memref<1x128xf32, #tpu.memory_space<vmem>>, %arg6: memref<256x128xf32, #tpu.memory_space<vmem>>) attributes {dimension_semantics = [#tpu.dimension_semantics<parallel>], iteration_bounds = array<i64: 1>, scalar_prefetch = 0 : i64, scratch_operands = 0 : i64, tpu.core_type = #tpu.core_type<tc>, window_params = [{transform_indices = @transform_0, window_bounds = array<i64: 256, 32>}, {pipeline_mode = #tpu.pipeline_mode<synchronous>, transform_indices = @transform_1, window_bounds = array<i64: 32, 128>}, {pipeline_mode = #tpu.pipeline_mode<synchronous>, transform_indices = @transform_2, window_bounds = array<i64: 1, 128>}, {pipeline_mode = #tpu.pipeline_mode<synchronous>, transform_indices = @transform_3, window_bounds = array<i64: 128, 128>}, {pipeline_mode = #tpu.pipeline_mode<synchronous>, transform_indices = @transform_4, window_bounds = array<i64: 1, 128>}, {transform_indices = @transform_5, window_bounds = array<i64: 256, 128>}]} {
    %c0 = arith.constant 0 : index
    %c0_0 = arith.constant 0 : index
    %0 = vector.load %arg1[%c0, %c0_0] : memref<256x32xf32, #tpu.memory_space<vmem>>, vector<256x32xf32>
    %c0_1 = arith.constant 0 : index
    %c0_2 = arith.constant 0 : index
    %1 = vector.load %arg2[%c0_1, %c0_2] : memref<32x128xf32, #tpu.memory_space<vmem>>, vector<32x128xf32>
    %cst = arith.constant dense<0.000000e+00> : vector<256x128xf32>
    %2 = tpu.matmul %0, %1, %cst {dimension_numbers = #tpu.dot_dimension_numbers<[1], [0], [0], [1], [0, 0, 1, 1], [], []>} : vector<256x32xf32>, vector<32x128xf32>, vector<256x128xf32> -> vector<256x128xf32>
    %c0_3 = arith.constant 0 : index
    %c0_4 = arith.constant 0 : index
    %3 = vector.load %arg3[%c0_3, %c0_4] : memref<1x128xf32, #tpu.memory_space<vmem>>, vector<1x128xf32>
    %4 = vector.broadcast %3 : vector<1x128xf32> to vector<256x128xf32>
    %5 = arith.addf %2, %4 : vector<256x128xf32>
    %cst_5 = arith.constant 0.000000e+00 : f32
    %6 = vector.broadcast %cst_5 : f32 to vector<256x128xf32>
    %7 = arith.maximumf %5, %6 : vector<256x128xf32>
    %c0_6 = arith.constant 0 : index
    %c0_7 = arith.constant 0 : index
    %8 = vector.load %arg4[%c0_6, %c0_7] : memref<128x128xf32, #tpu.memory_space<vmem>>, vector<128x128xf32>
    %cst_8 = arith.constant dense<0.000000e+00> : vector<256x128xf32>
    %9 = tpu.matmul %7, %8, %cst_8 {dimension_numbers = #tpu.dot_dimension_numbers<[1], [0], [0], [1], [0, 0, 1, 1], [], []>} : vector<256x128xf32>, vector<128x128xf32>, vector<256x128xf32> -> vector<256x128xf32>
    %c0_9 = arith.constant 0 : index
    %c0_10 = arith.constant 0 : index
    %10 = vector.load %arg5[%c0_9, %c0_10] : memref<1x128xf32, #tpu.memory_space<vmem>>, vector<1x128xf32>
    %11 = vector.broadcast %10 : vector<1x128xf32> to vector<256x128xf32>
    %12 = arith.addf %9, %11 : vector<256x128xf32>
    %c0_11 = arith.constant 0 : index
    %c0_12 = arith.constant 0 : index
    %13 = vector.load %arg6[%c0_11, %c0_12] : memref<256x128xf32, #tpu.memory_space<vmem>>, vector<256x128xf32>
    tpu.vector_store %arg6[%c0_11, %c0_12], %12 {strides = array<i32>} : memref<256x128xf32, #tpu.memory_space<vmem>>, vector<256x128xf32>,
    return
  }
  func.func @transform_0(%arg0: i32) -> (i32, i32) {
    %c0_i32 = arith.constant 0 : i32
    %c0_i32_0 = arith.constant 0 : i32
    return %arg0, %c0_i32 : i32, i32
  }
  func.func @transform_1(%arg0: i32) -> (i32, i32) {
    %c0_i32 = arith.constant 0 : i32
    %c0_i32_0 = arith.constant 0 : i32
    %c0_i32_1 = arith.constant 0 : i32
    return %c0_i32, %c0_i32_0 : i32, i32
  }
  func.func @transform_2(%arg0: i32) -> (i32, i32) {
    %c0_i32 = arith.constant 0 : i32
    %c0_i32_0 = arith.constant 0 : i32
    %c0_i32_1 = arith.constant 0 : i32
    return %c0_i32, %c0_i32_0 : i32, i32
  }
  func.func @transform_3(%arg0: i32) -> (i32, i32) {
    %c0_i32 = arith.constant 0 : i32
    %c0_i32_0 = arith.constant 0 : i32
    %c0_i32_1 = arith.constant 0 : i32
    return %c0_i32, %c0_i32_0 : i32, i32
  }
  func.func @transform_4(%arg0: i32) -> (i32, i32) {
    %c0_i32 = arith.constant 0 : i32
    %c0_i32_0 = arith.constant 0 : i32
    %c0_i32_1 = arith.constant 0 : i32
    return %c0_i32, %c0_i32_0 : i32, i32
  }
  func.func @transform_5(%arg0: i32) -> (i32, i32) {
    %c0_i32 = arith.constant 0 : i32
    %c0_i32_0 = arith.constant 0 : i32
    return %arg0, %c0_i32 : i32, i32
  }
}

</mosaic_0001>

<llo_original>
// kernel: two_layer_nn_padded.1
$region0: #{two_layer_nn_padded.1}
  #allocation0 [shape = 'u32[]', space=smem, size = 0x4, offset = 0x4, fixed_abs, tag = 'smem constant byte address 0x4 - core index']
  #allocation1 [shape = 'u32[144,128]{1,0:T(1,128)}', space=vmem, size = 0x12000, scoped, tag = 'internal scratch']
  %s0 = inlined_call_operand.vmem [shape: f32[256,32], index: 0, kind: input, shape index: {}]
  %s1 = inlined_call_operand.vmem [shape: f32[32,128], index: 1, kind: input, shape index: {}]
  %s2 = inlined_call_operand.vmem [shape: f32[1,128], index: 2, kind: input, shape index: {}]
  %s3 = inlined_call_operand.vmem [shape: f32[128,128], index: 3, kind: input, shape index: {}]
  %s4 = inlined_call_operand.vmem [shape: f32[1,128], index: 4, kind: input, shape index: {}]
  %s5 = inlined_call_operand.hbm [shape: f32[256,128], index: 5, kind: output, shape index: {}]
  %s6 = sld [smem:[#allocation0]]
  $region30: #{two_layer_nn_padded.1} parent=0
    _
  %s8 = ssub.s32 1, %s6
  %s9 = scalar_select 0, %s8, %s6
  $region1: #{two_layer_nn_padded.1} parent=0
    #allocation2 [shape = 'u8[131072]{0}', space=vmem, size = 0x20000, scoped, tag = 'output window, operand 0, single buffered']
    #allocation3 [shape = 's32[1]{0}', space=sflag, size = 0x4, scoped, tag = 'scoped memory for two_layer_nn_padded.1']
    %10 = vsyncpa [#allocation3], 0
    // Predicated region
    $region2: #{two_layer_nn_padded.1} parent=1 // pred_check
      _
    $region3: #{two_layer_nn_padded.1} parent=1 // pred_check_branch
      %12 = sbr.rel (0) target = $region5
    $region4: #{two_layer_nn_padded.1} parent=1 // pred_region
      _
    $region5: #{two_layer_nn_padded.1} parent=1 // pred_fallthru
      _
    // Predicated region
    $region6: #{two_layer_nn_padded.1} parent=1 // pred_check
      _
    $region7: #{two_layer_nn_padded.1} parent=1 // pred_check_branch
      %14 = sbr.rel (0) target = $region9
    $region8: #{two_layer_nn_padded.1} parent=1 // pred_region
      _
    $region9: #{two_layer_nn_padded.1} parent=1 // pred_fallthru
      _
    // Predicated region
    $region10: #{two_layer_nn_padded.1} parent=1 // pred_check
      _
    $region11: #{two_layer_nn_padded.1} parent=1 // pred_check_branch
      %16 = sbr.rel (0) target = $region13
    $region12: #{two_layer_nn_padded.1} parent=1 // pred_region
      _
    $region13: #{two_layer_nn_padded.1} parent=1 // pred_fallthru
      _
    // Predicated region
    $region14: #{two_layer_nn_padded.1} parent=1 // pred_check
      _
    $region15: #{two_layer_nn_padded.1} parent=1 // pred_check_branch
      %18 = sbr.rel (0) target = $region17
    $region16: #{two_layer_nn_padded.1} parent=1 // pred_region
      _
    $region17: #{two_layer_nn_padded.1} parent=1 // pred_fallthru
      _
    // Predicated region
    $region18: #{two_layer_nn_padded.1} parent=1 // pred_check
      _
    $region19: #{two_layer_nn_padded.1} parent=1 // pred_check_branch
      %20 = sbr.rel (0) target = $region21
    $region20: #{two_layer_nn_padded.1} parent=1 // pred_region
      _
    $region21: #{two_layer_nn_padded.1} parent=1 // pred_fallthru
      _
    %v21 = vld [vmem:[%s0] sm:$0xff]
    %v22 = vld [vmem:[%s0 + $0x8] sm:$0xff]
    %v23 = vld [vmem:[%s0 + $0x10] sm:$0xff]
    %v24 = vld [vmem:[%s0 + $0x18] sm:$0xff]
    %v25 = vld [vmem:[%s0 + $0x20] sm:$0xff]
    %v26 = vld [vmem:[%s0 + $0x28] sm:$0xff]
    %v27 = vld [vmem:[%s0 + $0x30] sm:$0xff]
    %v28 = vld [vmem:[%s0 + $0x38] sm:$0xff]
    %v29 = vld [vmem:[%s0 + $0x40] sm:$0xff]
    %v30 = vld [vmem:[%s0 + $0x48] sm:$0xff]
    %v31 = vld [vmem:[%s0 + $0x50] sm:$0xff]
    %v32 = vld [vmem:[%s0 + $0x58] sm:$0xff]
    %v33 = vld [vmem:[%s0 + $0x60] sm:$0xff]
    %v34 = vld [vmem:[%s0 + $0x68] sm:$0xff]
    %v35 = vld [vmem:[%s0 + $0x70] sm:$0xff]
    %v36 = vld [vmem:[%s0 + $0x78] sm:$0xff]
    %v37 = vld [vmem:[%s0 + $0x80] sm:$0xff]
    %v38 = vld [vmem:[%s0 + $0x88] sm:$0xff]
    %v39 = vld [vmem:[%s0 + $0x90] sm:$0xff]
    %v40 = vld [vmem:[%s0 + $0x98] sm:$0xff]
    %v41 = vld [vmem:[%s0 + $0xa0] sm:$0xff]
    %v42 = vld [vmem:[%s0 + $0xa8] sm:$0xff]
    %v43 = vld [vmem:[%s0 + $0xb0] sm:$0xff]
    %v44 = vld [vmem:[%s0 + $0xb8] sm:$0xff]
    %v45 = vld [vmem:[%s0 + $0xc0] sm:$0xff]
    %v46 = vld [vmem:[%s0 + $0xc8] sm:$0xff]
    %v47 = vld [vmem:[%s0 + $0xd0] sm:$0xff]
    %v48 = vld [vmem:[%s0 + $0xd8] sm:$0xff]
    %v49 = vld [vmem:[%s0 + $0xe0] sm:$0xff]
    %v50 = vld [vmem:[%s0 + $0xe8] sm:$0xff]
    %v51 = vld [vmem:[%s0 + $0xf0] sm:$0xff]
    %v52 = vld [vmem:[%s0 + $0xf8] sm:$0xff]
    %v53 = vld [vmem:[%s1] sm:$0xff]
    %v54 = vld [vmem:[%s1 + $0x8] sm:$0xff]
    %v55 = vld [vmem:[%s1 + $0x10] sm:$0xff]
    %v56 = vld [vmem:[%s1 + $0x18] sm:$0xff]
    %v57 = vld [vmem:[%s2] sm:$0x1]
    %v59 = vlaneseq
    %v60 = vshrl.u32 %v59, 7
    %v61 = vsub.s32 0, %v60
    %v62 = vrot.slane %v57, %v61
    %vm64 = vcmask 261120
    %v66 = vsel %vm64, %v21, 0
    %v69 = vsel %vm64, %v22, 0
    %v72 = vsel %vm64, %v23, 0
    %v75 = vsel %vm64, %v24, 0
    %v78 = vsel %vm64, %v25, 0
    %v81 = vsel %vm64, %v26, 0
    %v84 = vsel %vm64, %v27, 0
    %v87 = vsel %vm64, %v28, 0
    %v90 = vsel %vm64, %v29, 0
    %v93 = vsel %vm64, %v30, 0
    %v96 = vsel %vm64, %v31, 0
    %v99 = vsel %vm64, %v32, 0
    %v102 = vsel %vm64, %v33, 0
    %v105 = vsel %vm64, %v34, 0
    %v108 = vsel %vm64, %v35, 0
    %v111 = vsel %vm64, %v36, 0
    %v114 = vsel %vm64, %v37, 0
    %v117 = vsel %vm64, %v38, 0
    %v120 = vsel %vm64, %v39, 0
    %v123 = vsel %vm64, %v40, 0
    %v126 = vsel %vm64, %v41, 0
    %v129 = vsel %vm64, %v42, 0
    %v132 = vsel %vm64, %v43, 0
    %v135 = vsel %vm64, %v44, 0
    %v138 = vsel %vm64, %v45, 0
    %v141 = vsel %vm64, %v46, 0
    %v144 = vsel %vm64, %v47, 0
    %v147 = vsel %vm64, %v48, 0
    %v150 = vsel %vm64, %v49, 0
    %v153 = vsel %vm64, %v50, 0
    %v156 = vsel %vm64, %v51, 0
    %v159 = vsel %vm64, %v52, 0
    %161 = vmatprep.subr.mxu0 0.0
    %162 = vmatpush1.msra.mxu0 %v53
    %163 = vmatprep.subr.mxu0 0.0
    %164 = vmatpush1.msra.mxu0 %v54
    %165 = vmatprep.subr.mxu0 0.0
    %166 = vmatpush1.msra.mxu0 %v55
    %167 = vmatprep.subr.mxu0 0.0
    %168 = vmatpush1.msra.mxu0 %v56
    %169 = vmatprep.subr.mxu0 0.0
    %170 = vmatpush1.msra.mxu0 0.0
    %171 = vmatprep.subr.mxu0 0.0
    %172 = vmatpush1.msra.mxu0 0.0
    %173 = vmatprep.subr.mxu0 0.0
    %174 = vmatpush1.msra.mxu0 0.0
    %175 = vmatprep.subr.mxu0 0.0
    %176 = vmatpush1.msra.mxu0 0.0
    %177 = vmatprep.subr.mxu0 0.0
    %178 = vmatpush1.msra.mxu0 0.0
    %179 = vmatprep.subr.mxu0 0.0
    %180 = vmatpush1.msra.mxu0 0.0
    %181 = vmatprep.subr.mxu0 0.0
    %182 = vmatpush1.msra.mxu0 0.0
    %183 = vmatprep.subr.mxu0 0.0
    %184 = vmatpush1.msra.mxu0 0.0
    %185 = vmatprep.subr.mxu0 0.0
    %186 = vmatpush1.msra.mxu0 0.0
    %187 = vmatprep.subr.mxu0 0.0
    %188 = vmatpush1.msra.mxu0 0.0
    %189 = vmatprep.subr.mxu0 0.0
    %190 = vmatpush1.msra.mxu0 0.0
    %191 = vmatprep.subr.mxu0 0.0
    %192 = vmatpush1.msra.mxu0 0.0
    %193 = vmatprep.subr.mxu0 0.0
    %194 = vmatpush1.msra.mxu0 0.0
    %195 = vmatprep.subr.mxu0 0.0
    %196 = vmatpush1.msra.mxu0 0.0
    %197 = vmatprep.subr.mxu0 0.0
    %198 = vmatpush1.msra.mxu0 0.0
    %199 = vmatprep.subr.mxu0 0.0
    %200 = vmatpush1.msra.mxu0 0.0
    %201 = vmatprep.subr.mxu0 0.0
    %202 = vmatpush1.msra.mxu0 0.0
    %203 = vmatprep.subr.mxu0 0.0
    %204 = vmatpush1.msra.mxu0 0.0
    %205 = vmatprep.subr.mxu0 0.0
    %206 = vmatpush1.msra.mxu0 0.0
    %207 = vmatprep.subr.mxu0 0.0
    %208 = vmatpush1.msra.mxu0 0.0
    %209 = vmatprep.subr.mxu0 0.0
    %210 = vmatpush1.msra.mxu0 0.0
    %211 = vmatprep.subr.mxu0 0.0
    %212 = vmatpush1.msra.mxu0 0.0
    %213 = vmatprep.subr.mxu0 0.0
    %214 = vmatpush1.msra.mxu0 0.0
    %215 = vmatprep.subr.mxu0 0.0
    %216 = vmatpush1.msra.mxu0 0.0
    %217 = vmatprep.subr.mxu0 0.0
    %218 = vmatpush1.msra.mxu0 0.0
    %219 = vmatprep.subr.mxu0 0.0
    %220 = vmatpush1.msra.mxu0 0.0
    %221 = vmatprep.subr.mxu0 0.0
    %222 = vmatpush1.msra.mxu0 0.0
    %223 = vmatprep.subr.mxu0 0.0
    %224 = vmatpush1.msra.mxu0 0.0
    %225 = vmatprep.mubr.f32.mxu0 0.0
    %226 = vmatmul.mubr.f32.gmra.mrb[0].mxu0 %v66
    %v227 = vpop.f32.mrb[0].mxu0
    %v228 = vadd.f32 %v62, %v227
    %v229 = vpop.f32.mrb[0].mxu0
    %230 = vmatprep.mubr.f32.mxu0 0.0
    %231 = vmatmul.mubr.f32.gmra.mrb[0].mxu0 %v69
    %v232 = vpop.f32.mrb[0].mxu0
    %v233 = vadd.f32 %v62, %v232
    %v234 = vpop.f32.mrb[0].mxu0
    %235 = vmatprep.mubr.f32.mxu0 0.0
    %236 = vmatmul.mubr.f32.gmra.mrb[0].mxu0 %v72
    %v237 = vpop.f32.mrb[0].mxu0
    %v238 = vadd.f32 %v62, %v237
    %v239 = vpop.f32.mrb[0].mxu0
    %240 = vmatprep.mubr.f32.mxu0 0.0
    %241 = vmatmul.mubr.f32.gmra.mrb[0].mxu0 %v75
    %v242 = vpop.f32.mrb[0].mxu0
    %v243 = vadd.f32 %v62, %v242
    %v244 = vpop.f32.mrb[0].mxu0
    %245 = vmatprep.mubr.f32.mxu0 0.0
    %246 = vmatmul.mubr.f32.gmra.mrb[0].mxu0 %v78
    %v247 = vpop.f32.mrb[0].mxu0
    %v248 = vadd.f32 %v62, %v247
    %v249 = vpop.f32.mrb[0].mxu0
    %250 = vmatprep.mubr.f32.mxu0 0.0
    %251 = vmatmul.mubr.f32.gmra.mrb[0].mxu0 %v81
    %v252 = vpop.f32.mrb[0].mxu0
    %v253 = vadd.f32 %v62, %v252
    %v254 = vpop.f32.mrb[0].mxu0
    %255 = vmatprep.mubr.f32.mxu0 0.0
    %256 = vmatmul.mubr.f32.gmra.mrb[0].mxu0 %v84
    %v257 = vpop.f32.mrb[0].mxu0
    %v258 = vadd.f32 %v62, %v257
    %v259 = vpop.f32.mrb[0].mxu0
    %260 = vmatprep.mubr.f32.mxu0 0.0
    %261 = vmatmul.mubr.f32.gmra.mrb[0].mxu0 %v87
    %v262 = vpop.f32.mrb[0].mxu0
    %v263 = vadd.f32 %v62, %v262
    %v264 = vpop.f32.mrb[0].mxu0
    %265 = vmatprep.mubr.f32.mxu0 0.0
    %266 = vmatmul.mubr.f32.gmra.mrb[0].mxu0 %v90
    %v267 = vpop.f32.mrb[0].mxu0
    %v268 = vadd.f32 %v62, %v267
    %v269 = vpop.f32.mrb[0].mxu0
    %270 = vmatprep.mubr.f32.mxu0 0.0
    %271 = vmatmul.mubr.f32.gmra.mrb[0].mxu0 %v93
    %v272 = vpop.f32.mrb[0].mxu0
    %v273 = vadd.f32 %v62, %v272
    %v274 = vpop.f32.mrb[0].mxu0
    %275 = vmatprep.mubr.f32.mxu0 0.0
    %276 = vmatmul.mubr.f32.gmra.mrb[0].mxu0 %v96
    %v277 = vpop.f32.mrb[0].mxu0
    %v278 = vadd.f32 %v62, %v277
    %v279 = vpop.f32.mrb[0].mxu0
    %280 = vmatprep.mubr.f32.mxu0 0.0
    %281 = vmatmul.mubr.f32.gmra.mrb[0].mxu0 %v99
    %v282 = vpop.f32.mrb[0].mxu0
    %v283 = vadd.f32 %v62, %v282
    %v284 = vpop.f32.mrb[0].mxu0
    %285 = vmatprep.mubr.f32.mxu0 0.0
    %286 = vmatmul.mubr.f32.gmra.mrb[0].mxu0 %v102
    %v287 = vpop.f32.mrb[0].mxu0
    %v288 = vadd.f32 %v62, %v287
    %v289 = vpop.f32.mrb[0].mxu0
    %290 = vmatprep.mubr.f32.mxu0 0.0
    %291 = vmatmul.mubr.f32.gmra.mrb[0].mxu0 %v105
    %v292 = vpop.f32.mrb[0].mxu0
    %v293 = vadd.f32 %v62, %v292
    %v294 = vpop.f32.mrb[0].mxu0
    %295 = vmatprep.mubr.f32.mxu0 0.0
    %296 = vmatmul.mubr.f32.gmra.mrb[0].mxu0 %v108
    %v297 = vpop.f32.mrb[0].mxu0
    %v298 = vadd.f32 %v62, %v297
    %v299 = vpop.f32.mrb[0].mxu0
    %300 = vmatprep.mubr.f32.mxu0 0.0
    %301 = vmatmul.mubr.f32.gmra.mrb[0].mxu0 %v111
    %v302 = vpop.f32.mrb[0].mxu0
    %v303 = vadd.f32 %v62, %v302
    %v304 = vpop.f32.mrb[0].mxu0
    %305 = vmatprep.mubr.f32.mxu0 0.0
    %306 = vmatmul.mubr.f32.gmra.mrb[0].mxu0 %v114
    %v307 = vpop.f32.mrb[0].mxu0
    %v308 = vadd.f32 %v62, %v307
    %v309 = vpop.f32.mrb[0].mxu0
    %310 = vmatprep.mubr.f32.mxu0 0.0
    %311 = vmatmul.mubr.f32.gmra.mrb[0].mxu0 %v117
    %v312 = vpop.f32.mrb[0].mxu0
    %v313 = vadd.f32 %v62, %v312
    %v314 = vpop.f32.mrb[0].mxu0
    %315 = vmatprep.mubr.f32.mxu0 0.0
    %316 = vmatmul.mubr.f32.gmra.mrb[0].mxu0 %v120
    %v317 = vpop.f32.mrb[0].mxu0
    %v318 = vadd.f32 %v62, %v317
    %v319 = vpop.f32.mrb[0].mxu0
    %320 = vmatprep.mubr.f32.mxu0 0.0
    %321 = vmatmul.mubr.f32.gmra.mrb[0].mxu0 %v123
    %v322 = vpop.f32.mrb[0].mxu0
    %v323 = vadd.f32 %v62, %v322
    %v324 = vpop.f32.mrb[0].mxu0
    %325 = vmatprep.mubr.f32.mxu0 0.0
    %326 = vmatmul.mubr.f32.gmra.mrb[0].mxu0 %v126
    %v327 = vpop.f32.mrb[0].mxu0
    %v328 = vadd.f32 %v62, %v327
    %v329 = vpop.f32.mrb[0].mxu0
    %330 = vmatprep.mubr.f32.mxu0 0.0
    %331 = vmatmul.mubr.f32.gmra.mrb[0].mxu0 %v129
    %v332 = vpop.f32.mrb[0].mxu0
    %v333 = vadd.f32 %v62, %v332
    %v334 = vpop.f32.mrb[0].mxu0
    %335 = vmatprep.mubr.f32.mxu0 0.0
    %336 = vmatmul.mubr.f32.gmra.mrb[0].mxu0 %v132
    %v337 = vpop.f32.mrb[0].mxu0
    %v338 = vadd.f32 %v62, %v337
    %v339 = vpop.f32.mrb[0].mxu0
    %340 = vmatprep.mubr.f32.mxu0 0.0
    %341 = vmatmul.mubr.f32.gmra.mrb[0].mxu0 %v135
    %v342 = vpop.f32.mrb[0].mxu0
    %v343 = vadd.f32 %v62, %v342
    %v344 = vpop.f32.mrb[0].mxu0
    %345 = vmatprep.mubr.f32.mxu0 0.0
    %346 = vmatmul.mubr.f32.gmra.mrb[0].mxu0 %v138
    %v347 = vpop.f32.mrb[0].mxu0
    %v348 = vadd.f32 %v62, %v347
    %v349 = vpop.f32.mrb[0].mxu0
    %350 = vmatprep.mubr.f32.mxu0 0.0
    %351 = vmatmul.mubr.f32.gmra.mrb[0].mxu0 %v141
    %v352 = vpop.f32.mrb[0].mxu0
    %v353 = vadd.f32 %v62, %v352
    %v354 = vpop.f32.mrb[0].mxu0
    %355 = vmatprep.mubr.f32.mxu0 0.0
    %356 = vmatmul.mubr.f32.gmra.mrb[0].mxu0 %v144
    %v357 = vpop.f32.mrb[0].mxu0
    %v358 = vadd.f32 %v62, %v357
    %v359 = vpop.f32.mrb[0].mxu0
    %360 = vmatprep.mubr.f32.mxu0 0.0
    %361 = vmatmul.mubr.f32.gmra.mrb[0].mxu0 %v147
    %v362 = vpop.f32.mrb[0].mxu0
    %v363 = vadd.f32 %v62, %v362
    %v364 = vpop.f32.mrb[0].mxu0
    %365 = vmatprep.mubr.f32.mxu0 0.0
    %366 = vmatmul.mubr.f32.gmra.mrb[0].mxu0 %v150
    %v367 = vpop.f32.mrb[0].mxu0
    %v368 = vadd.f32 %v62, %v367
    %v369 = vpop.f32.mrb[0].mxu0
    %370 = vmatprep.mubr.f32.mxu0 0.0
    %371 = vmatmul.mubr.f32.gmra.mrb[0].mxu0 %v153
    %v372 = vpop.f32.mrb[0].mxu0
    %v373 = vadd.f32 %v62, %v372
    %v374 = vpop.f32.mrb[0].mxu0
    %375 = vmatprep.mubr.f32.mxu0 0.0
    %376 = vmatmul.mubr.f32.gmra.mrb[0].mxu0 %v156
    %v377 = vpop.f32.mrb[0].mxu0
    %v378 = vadd.f32 %v62, %v377
    %v379 = vpop.f32.mrb[0].mxu0
    %380 = vmatprep.mubr.f32.mxu0 0.0
    %381 = vmatmul.mubr.f32.gmra.mrb[0].mxu0 %v159
    %v382 = vpop.f32.mrb[0].mxu0
    %v383 = vadd.f32 %v62, %v382
    %v384 = vpop.f32.mrb[0].mxu0
    %385 = vdwg.mxu0
    %v386 = vmax.f32 %v228, 0.0
    %v387 = vmax.f32 %v233, 0.0
    %v388 = vmax.f32 %v238, 0.0
    %v389 = vmax.f32 %v243, 0.0
    %v390 = vmax.f32 %v248, 0.0
    %v391 = vmax.f32 %v253, 0.0
    %v392 = vmax.f32 %v258, 0.0
    %v393 = vmax.f32 %v263, 0.0
    %v394 = vmax.f32 %v268, 0.0
    %v395 = vmax.f32 %v273, 0.0
    %v396 = vmax.f32 %v278, 0.0
    %v397 = vmax.f32 %v283, 0.0
    %v398 = vmax.f32 %v288, 0.0
    %v399 = vmax.f32 %v293, 0.0
    %v400 = vmax.f32 %v298, 0.0
    %v401 = vmax.f32 %v303, 0.0
    %v402 = vmax.f32 %v308, 0.0
    %v403 = vmax.f32 %v313, 0.0
    %v404 = vmax.f32 %v318, 0.0
    %v405 = vmax.f32 %v323, 0.0
    %v406 = vmax.f32 %v328, 0.0
    %v407 = vmax.f32 %v333, 0.0
    %v408 = vmax.f32 %v338, 0.0
    %v409 = vmax.f32 %v343, 0.0
    %v410 = vmax.f32 %v348, 0.0
    %v411 = vmax.f32 %v353, 0.0
    %v412 = vmax.f32 %v358, 0.0
    %v413 = vmax.f32 %v363, 0.0
    %v414 = vmax.f32 %v368, 0.0
    %v415 = vmax.f32 %v373, 0.0
    %v416 = vmax.f32 %v378, 0.0
    %v417 = vmax.f32 %v383, 0.0
    %v418 = vld [vmem:[%s3] sm:$0xff]
    %v419 = vld [vmem:[%s3 + $0x8] sm:$0xff]
    %v420 = vld [vmem:[%s3 + $0x10] sm:$0xff]
    %v421 = vld [vmem:[%s3 + $0x18] sm:$0xff]
    %v422 = vld [vmem:[%s3 + $0x20] sm:$0xff]
    %v423 = vld [vmem:[%s3 + $0x28] sm:$0xff]
    %v424 = vld [vmem:[%s3 + $0x30] sm:$0xff]
    %v425 = vld [vmem:[%s3 + $0x38] sm:$0xff]
    %v426 = vld [vmem:[%s3 + $0x40] sm:$0xff]
    %v427 = vld [vmem:[%s3 + $0x48] sm:$0xff]
    %v428 = vld [vmem:[%s3 + $0x50] sm:$0xff]
    %v429 = vld [vmem:[%s3 + $0x58] sm:$0xff]
    %v430 = vld [vmem:[%s3 + $0x60] sm:$0xff]
    %v431 = vld [vmem:[%s3 + $0x68] sm:$0xff]
    %v432 = vld [vmem:[%s3 + $0x70] sm:$0xff]
    %v433 = vld [vmem:[%s3 + $0x78] sm:$0xff]
    %v434 = vld [vmem:[%s4] sm:$0x1]
    %v436 = vlaneseq
    %v437 = vshrl.u32 %v436, 7
    %v438 = vsub.s32 0, %v437
    %v439 = vrot.slane %v434, %v438
    %441 = vmatprep.subr.mxu0 0.0
    %442 = vmatpush1.msra.mxu0 %v418
    %443 = vmatprep.subr.mxu0 0.0
    %444 = vmatpush1.msra.mxu0 %v419
    %445 = vmatprep.subr.mxu0 0.0
    %446 = vmatpush1.msra.mxu0 %v420
    %447 = vmatprep.subr.mxu0 0.0
    %448 = vmatpush1.msra.mxu0 %v421
    %449 = vmatprep.subr.mxu0 0.0
    %450 = vmatpush1.msra.mxu0 %v422
    %451 = vmatprep.subr.mxu0 0.0
    %452 = vmatpush1.msra.mxu0 %v423
    %453 = vmatprep.subr.mxu0 0.0
    %454 = vmatpush1.msra.mxu0 %v424
    %455 = vmatprep.subr.mxu0 0.0
    %456 = vmatpush1.msra.mxu0 %v425
    %457 = vmatprep.subr.mxu0 0.0
    %458 = vmatpush1.msra.mxu0 %v426
    %459 = vmatprep.subr.mxu0 0.0
    %460 = vmatpush1.msra.mxu0 %v427
    %461 = vmatprep.subr.mxu0 0.0
    %462 = vmatpush1.msra.mxu0 %v428
    %463 = vmatprep.subr.mxu0 0.0
    %464 = vmatpush1.msra.mxu0 %v429
    %465 = vmatprep.subr.mxu0 0.0
    %466 = vmatpush1.msra.mxu0 %v430
    %467 = vmatprep.subr.mxu0 0.0
    %468 = vmatpush1.msra.mxu0 %v431
    %469 = vmatprep.subr.mxu0 0.0
    %470 = vmatpush1.msra.mxu0 %v432
    %471 = vmatprep.subr.mxu0 0.0
    %472 = vmatpush1.msra.mxu0 %v433
    %473 = vmatprep.subr.mxu0 0.0
    %474 = vmatpush1.msra.mxu0 0.0
    %475 = vmatprep.subr.mxu0 0.0
    %476 = vmatpush1.msra.mxu0 0.0
    %477 = vmatprep.subr.mxu0 0.0
    %478 = vmatpush1.msra.mxu0 0.0
    %479 = vmatprep.subr.mxu0 0.0
    %480 = vmatpush1.msra.mxu0 0.0
    %481 = vmatprep.subr.mxu0 0.0
    %482 = vmatpush1.msra.mxu0 0.0
    %483 = vmatprep.subr.mxu0 0.0
    %484 = vmatpush1.msra.mxu0 0.0
    %485 = vmatprep.subr.mxu0 0.0
    %486 = vmatpush1.msra.mxu0 0.0
    %487 = vmatprep.subr.mxu0 0.0
    %488 = vmatpush1.msra.mxu0 0.0
    %489 = vmatprep.subr.mxu0 0.0
    %490 = vmatpush1.msra.mxu0 0.0
    %491 = vmatprep.subr.mxu0 0.0
    %492 = vmatpush1.msra.mxu0 0.0
    %493 = vmatprep.subr.mxu0 0.0
    %494 = vmatpush1.msra.mxu0 0.0
    %495 = vmatprep.subr.mxu0 0.0
    %496 = vmatpush1.msra.mxu0 0.0
    %497 = vmatprep.subr.mxu0 0.0
    %498 = vmatpush1.msra.mxu0 0.0
    %499 = vmatprep.subr.mxu0 0.0
    %500 = vmatpush1.msra.mxu0 0.0
    %501 = vmatprep.subr.mxu0 0.0
    %502 = vmatpush1.msra.mxu0 0.0
    %503 = vmatprep.subr.mxu0 0.0
    %504 = vmatpush1.msra.mxu0 0.0
    %505 = vmatprep.mubr.f32.mxu0 0.0
    %506 = vmatmul.mubr.f32.gmra.mrb[0].mxu0 %v386
    %v507 = vpop.f32.mrb[0].mxu0
    %v508 = vadd.f32 %v439, %v507
    %v509 = vpop.f32.mrb[0].mxu0
    %510 = vmatprep.mubr.f32.mxu0 0.0
    %511 = vmatmul.mubr.f32.gmra.mrb[0].mxu0 %v387
    %v512 = vpop.f32.mrb[0].mxu0
    %v513 = vadd.f32 %v439, %v512
    %v514 = vpop.f32.mrb[0].mxu0
    %515 = vmatprep.mubr.f32.mxu0 0.0
    %516 = vmatmul.mubr.f32.gmra.mrb[0].mxu0 %v388
    %v517 = vpop.f32.mrb[0].mxu0
    %v518 = vadd.f32 %v439, %v517
    %v519 = vpop.f32.mrb[0].mxu0
    %520 = vmatprep.mubr.f32.mxu0 0.0
    %521 = vmatmul.mubr.f32.gmra.mrb[0].mxu0 %v389
    %v522 = vpop.f32.mrb[0].mxu0
    %v523 = vadd.f32 %v439, %v522
    %v524 = vpop.f32.mrb[0].mxu0
    %525 = vmatprep.mubr.f32.mxu0 0.0
    %526 = vmatmul.mubr.f32.gmra.mrb[0].mxu0 %v390
    %v527 = vpop.f32.mrb[0].mxu0
    %v528 = vadd.f32 %v439, %v527
    %v529 = vpop.f32.mrb[0].mxu0
    %530 = vmatprep.mubr.f32.mxu0 0.0
    %531 = vmatmul.mubr.f32.gmra.mrb[0].mxu0 %v391
    %v532 = vpop.f32.mrb[0].mxu0
    %v533 = vadd.f32 %v439, %v532
    %v534 = vpop.f32.mrb[0].mxu0
    %535 = vmatprep.mubr.f32.mxu0 0.0
    %536 = vmatmul.mubr.f32.gmra.mrb[0].mxu0 %v392
    %v537 = vpop.f32.mrb[0].mxu0
    %v538 = vadd.f32 %v439, %v537
    %v539 = vpop.f32.mrb[0].mxu0
    %540 = vmatprep.mubr.f32.mxu0 0.0
    %541 = vmatmul.mubr.f32.gmra.mrb[0].mxu0 %v393
    %v542 = vpop.f32.mrb[0].mxu0
    %v543 = vadd.f32 %v439, %v542
    %v544 = vpop.f32.mrb[0].mxu0
    %545 = vmatprep.mubr.f32.mxu0 0.0
    %546 = vmatmul.mubr.f32.gmra.mrb[0].mxu0 %v394
    %v547 = vpop.f32.mrb[0].mxu0
    %v548 = vadd.f32 %v439, %v547
    %v549 = vpop.f32.mrb[0].mxu0
    %550 = vmatprep.mubr.f32.mxu0 0.0
    %551 = vmatmul.mubr.f32.gmra.mrb[0].mxu0 %v395
    %v552 = vpop.f32.mrb[0].mxu0
    %v553 = vadd.f32 %v439, %v552
    %v554 = vpop.f32.mrb[0].mxu0
    %555 = vmatprep.mubr.f32.mxu0 0.0
    %556 = vmatmul.mubr.f32.gmra.mrb[0].mxu0 %v396
    %v557 = vpop.f32.mrb[0].mxu0
    %v558 = vadd.f32 %v439, %v557
    %v559 = vpop.f32.mrb[0].mxu0
    %560 = vmatprep.mubr.f32.mxu0 0.0
    %561 = vmatmul.mubr.f32.gmra.mrb[0].mxu0 %v397
    %v562 = vpop.f32.mrb[0].mxu0
    %v563 = vadd.f32 %v439, %v562
    %v564 = vpop.f32.mrb[0].mxu0
    %565 = vmatprep.mubr.f32.mxu0 0.0
    %566 = vmatmul.mubr.f32.gmra.mrb[0].mxu0 %v398
    %v567 = vpop.f32.mrb[0].mxu0
    %v568 = vadd.f32 %v439, %v567
    %v569 = vpop.f32.mrb[0].mxu0
    %570 = vmatprep.mubr.f32.mxu0 0.0
    %571 = vmatmul.mubr.f32.gmra.mrb[0].mxu0 %v399
    %v572 = vpop.f32.mrb[0].mxu0
    %v573 = vadd.f32 %v439, %v572
    %v574 = vpop.f32.mrb[0].mxu0
    %575 = vmatprep.mubr.f32.mxu0 0.0
    %576 = vmatmul.mubr.f32.gmra.mrb[0].mxu0 %v400
    %v577 = vpop.f32.mrb[0].mxu0
    %v578 = vadd.f32 %v439, %v577
    %v579 = vpop.f32.mrb[0].mxu0
    %580 = vmatprep.mubr.f32.mxu0 0.0
    %581 = vmatmul.mubr.f32.gmra.mrb[0].mxu0 %v401
    %v582 = vpop.f32.mrb[0].mxu0
    %v583 = vadd.f32 %v439, %v582
    %v584 = vpop.f32.mrb[0].mxu0
    %585 = vmatprep.mubr.f32.mxu0 0.0
    %586 = vmatmul.mubr.f32.gmra.mrb[0].mxu0 %v402
    %v587 = vpop.f32.mrb[0].mxu0
    %v588 = vadd.f32 %v439, %v587
    %v589 = vpop.f32.mrb[0].mxu0
    %590 = vmatprep.mubr.f32.mxu0 0.0
    %591 = vmatmul.mubr.f32.gmra.mrb[0].mxu0 %v403
    %v592 = vpop.f32.mrb[0].mxu0
    %v593 = vadd.f32 %v439, %v592
    %v594 = vpop.f32.mrb[0].mxu0
    %595 = vmatprep.mubr.f32.mxu0 0.0
    %596 = vmatmul.mubr.f32.gmra.mrb[0].mxu0 %v404
    %v597 = vpop.f32.mrb[0].mxu0
    %v598 = vadd.f32 %v439, %v597
    %v599 = vpop.f32.mrb[0].mxu0
    %600 = vmatprep.mubr.f32.mxu0 0.0
    %601 = vmatmul.mubr.f32.gmra.mrb[0].mxu0 %v405
    %v602 = vpop.f32.mrb[0].mxu0
    %v603 = vadd.f32 %v439, %v602
    %v604 = vpop.f32.mrb[0].mxu0
    %605 = vmatprep.mubr.f32.mxu0 0.0
    %606 = vmatmul.mubr.f32.gmra.mrb[0].mxu0 %v406
    %v607 = vpop.f32.mrb[0].mxu0
    %v608 = vadd.f32 %v439, %v607
    %v609 = vpop.f32.mrb[0].mxu0
    %610 = vmatprep.mubr.f32.mxu0 0.0
    %611 = vmatmul.mubr.f32.gmra.mrb[0].mxu0 %v407
    %v612 = vpop.f32.mrb[0].mxu0
    %v613 = vadd.f32 %v439, %v612
    %v614 = vpop.f32.mrb[0].mxu0
    %615 = vmatprep.mubr.f32.mxu0 0.0
    %616 = vmatmul.mubr.f32.gmra.mrb[0].mxu0 %v408
    %v617 = vpop.f32.mrb[0].mxu0
    %v618 = vadd.f32 %v439, %v617
    %v619 = vpop.f32.mrb[0].mxu0
    %620 = vmatprep.mubr.f32.mxu0 0.0
    %621 = vmatmul.mubr.f32.gmra.mrb[0].mxu0 %v409
    %v622 = vpop.f32.mrb[0].mxu0
    %v623 = vadd.f32 %v439, %v622
    %v624 = vpop.f32.mrb[0].mxu0
    %625 = vmatprep.mubr.f32.mxu0 0.0
    %626 = vmatmul.mubr.f32.gmra.mrb[0].mxu0 %v410
    %v627 = vpop.f32.mrb[0].mxu0
    %v628 = vadd.f32 %v439, %v627
    %v629 = vpop.f32.mrb[0].mxu0
    %630 = vmatprep.mubr.f32.mxu0 0.0
    %631 = vmatmul.mubr.f32.gmra.mrb[0].mxu0 %v411
    %v632 = vpop.f32.mrb[0].mxu0
    %v633 = vadd.f32 %v439, %v632
    %v634 = vpop.f32.mrb[0].mxu0
    %635 = vmatprep.mubr.f32.mxu0 0.0
    %636 = vmatmul.mubr.f32.gmra.mrb[0].mxu0 %v412
    %v637 = vpop.f32.mrb[0].mxu0
    %v638 = vadd.f32 %v439, %v637
    %v639 = vpop.f32.mrb[0].mxu0
    %640 = vmatprep.mubr.f32.mxu0 0.0
    %641 = vmatmul.mubr.f32.gmra.mrb[0].mxu0 %v413
    %v642 = vpop.f32.mrb[0].mxu0
    %v643 = vadd.f32 %v439, %v642
    %v644 = vpop.f32.mrb[0].mxu0
    %645 = vmatprep.mubr.f32.mxu0 0.0
    %646 = vmatmul.mubr.f32.gmra.mrb[0].mxu0 %v414
    %v647 = vpop.f32.mrb[0].mxu0
    %v648 = vadd.f32 %v439, %v647
    %v649 = vpop.f32.mrb[0].mxu0
    %650 = vmatprep.mubr.f32.mxu0 0.0
    %651 = vmatmul.mubr.f32.gmra.mrb[0].mxu0 %v415
    %v652 = vpop.f32.mrb[0].mxu0
    %v653 = vadd.f32 %v439, %v652
    %v654 = vpop.f32.mrb[0].mxu0
    %655 = vmatprep.mubr.f32.mxu0 0.0
    %656 = vmatmul.mubr.f32.gmra.mrb[0].mxu0 %v416
    %v657 = vpop.f32.mrb[0].mxu0
    %v658 = vadd.f32 %v439, %v657
    %v659 = vpop.f32.mrb[0].mxu0
    %660 = vmatprep.mubr.f32.mxu0 0.0
    %661 = vmatmul.mubr.f32.gmra.mrb[0].mxu0 %v417
    %v662 = vpop.f32.mrb[0].mxu0
    %v663 = vadd.f32 %v439, %v662
    %v664 = vpop.f32.mrb[0].mxu0
    %665 = vdwg.mxu0
    %666 = vst [vmem:[#allocation2] sm:$0xff] %v508
    %667 = vst [vmem:[#allocation2 + $0x8] sm:$0xff] %v513
    %668 = vst [vmem:[#allocation2 + $0x10] sm:$0xff] %v518
    %669 = vst [vmem:[#allocation2 + $0x18] sm:$0xff] %v523
    %670 = vst [vmem:[#allocation2 + $0x20] sm:$0xff] %v528
    %671 = vst [vmem:[#allocation2 + $0x28] sm:$0xff] %v533
    %672 = vst [vmem:[#allocation2 + $0x30] sm:$0xff] %v538
    %673 = vst [vmem:[#allocation2 + $0x38] sm:$0xff] %v543
    %674 = vst [vmem:[#allocation2 + $0x40] sm:$0xff] %v548
    %675 = vst [vmem:[#allocation2 + $0x48] sm:$0xff] %v553
    %676 = vst [vmem:[#allocation2 + $0x50] sm:$0xff] %v558
    %677 = vst [vmem:[#allocation2 + $0x58] sm:$0xff] %v563
    %678 = vst [vmem:[#allocation2 + $0x60] sm:$0xff] %v568
    %679 = vst [vmem:[#allocation2 + $0x68] sm:$0xff] %v573
    %680 = vst [vmem:[#allocation2 + $0x70] sm:$0xff] %v578
    %681 = vst [vmem:[#allocation2 + $0x78] sm:$0xff] %v583
    %682 = vst [vmem:[#allocation2 + $0x80] sm:$0xff] %v588
    %683 = vst [vmem:[#allocation2 + $0x88] sm:$0xff] %v593
    %684 = vst [vmem:[#allocation2 + $0x90] sm:$0xff] %v598
    %685 = vst [vmem:[#allocation2 + $0x98] sm:$0xff] %v603
    %686 = vst [vmem:[#allocation2 + $0xa0] sm:$0xff] %v608
    %687 = vst [vmem:[#allocation2 + $0xa8] sm:$0xff] %v613
    %688 = vst [vmem:[#allocation2 + $0xb0] sm:$0xff] %v618
    %689 = vst [vmem:[#allocation2 + $0xb8] sm:$0xff] %v623
    %690 = vst [vmem:[#allocation2 + $0xc0] sm:$0xff] %v628
    %691 = vst [vmem:[#allocation2 + $0xc8] sm:$0xff] %v633
    %692 = vst [vmem:[#allocation2 + $0xd0] sm:$0xff] %v638
    %693 = vst [vmem:[#allocation2 + $0xd8] sm:$0xff] %v643
    %694 = vst [vmem:[#allocation2 + $0xe0] sm:$0xff] %v648
    %695 = vst [vmem:[#allocation2 + $0xe8] sm:$0xff] %v653
    %696 = vst [vmem:[#allocation2 + $0xf0] sm:$0xff] %v658
    %697 = vst [vmem:[#allocation2 + $0xf8] sm:$0xff] %v663
    // Predicated region
    $region22: #{two_layer_nn_padded.1} parent=1 // pred_check
      _
    $region23: #{two_layer_nn_padded.1} parent=1 // pred_check_branch
      %699 = sbr.rel (0) target = $region25
    $region24: #{two_layer_nn_padded.1} parent=1 // pred_region
      %s701 = ssub.s32 4096, 4096
      %702 = vsyncadd [#allocation3], %s701
      %s703 = sshll.u32 [#allocation2], 4
      %s704 = int_to_ptr.vmem [resolvable:$true] %s703
      %709 = dma.vmem_to_hbm [thread:$0]  %s704, 4096, %s5, [#allocation3], 128, 128, 8
    $region25: #{two_layer_nn_padded.1} parent=1 // pred_fallthru
      _
    // Predicated region
    $region26: #{two_layer_nn_padded.1} parent=1 // pred_check
      _
    $region27: #{two_layer_nn_padded.1} parent=1 // pred_check_branch
      %711 = sbr.rel (0) target = $region29
    $region28: #{two_layer_nn_padded.1} parent=1 // pred_region
      %712 = dma.done [#allocation3], 4096
    $region29: #{two_layer_nn_padded.1} parent=1 // pred_fallthru
      _
    %713 = vsyncpa [#allocation3], 1

</llo_original>
